<compile_context>
chip_gen: v7x
topology: tpu7x:2x2x1
jax: 0.10.0
libtpu: 0.0.40
codegen_flags: <defaults>
</compile_context>

<pallas_src>
import functools

import jax
import jax.numpy as jnp
from jax.experimental import pallas as pl
from jax.experimental.pallas import tpu as pltpu  # noqa: F401  (TPU-specific namespace)


# ---------------------------------------------------------------------------
# Fused kernel: cosine sim -> top-N -> per-batch compaction -> loss -> gather
# ---------------------------------------------------------------------------
def _prompt_pool_fused_kernel(x_ref, keys_ref, pool_ref, out_ref, loss_ref, *,
                              n_select, per_batch_prompt):
    x = x_ref[...]                        # [B, pd]   f32
    kn = keys_ref[...]                    # [M, pd]   f32 (pre-normalized keys)
    pool = pool_ref[...]                  # [M, Lp*d] pool dtype

    B = x.shape[0]
    M = pool.shape[0]
    N = n_select
    BN = B * N

    # --- cosine similarity: normalize x in-kernel (EUP rsqrt), contract last
    #     dims directly on the MXU (no explicit transpose / XLU relayout).
    eps = jnp.float32(1e-12)
    xn = x * jax.lax.rsqrt(jnp.maximum(jnp.sum(x * x, axis=-1, keepdims=True),
                                       eps * eps))
    sim = jax.lax.dot_general(xn, kn, (((1,), (1,)), ((), ())),
                              preferred_element_type=jnp.float32)          # [B, M]

    # --- per-row top-N via iterative argmax (lowest-index tie-break).
    # TODO(synk): torch.topk's tie order is unspecified; exact similarity ties
    # may select different (equally valid) prompts.
    col = jax.lax.broadcasted_iota(jnp.int32, (B, M), 1)
    ncol = jax.lax.broadcasted_iota(jnp.int32, (B, N), 1)
    neg_inf = jnp.float32(-jnp.inf)
    s = sim
    idx = jnp.zeros((B, N), jnp.int32)
    counts = jnp.zeros((1, M), jnp.float32)   # selection counts of the per-row idx
    for n in range(N):
        row_max = jnp.max(s, axis=-1, keepdims=True)                        # [B, 1]
        amax = jnp.min(jnp.where(s == row_max, col, M), axis=-1, keepdims=True)
        idx = jnp.where(ncol == n, amax, idx)
        if per_batch_prompt:
            counts = counts + jnp.sum((col == amax).astype(jnp.float32),
                                      axis=0, keepdims=True)
        s = jnp.where(col == amax, neg_inf, s)

    # --- per-batch compaction: everyone uses the N most-frequent prompt ids.
    # Matches the torch reference exactly: the replacement only applies when
    # fewer than M unique ids were selected (`if prompt_id.shape[0] < self._M`).
    final_idx = idx
    if per_batch_prompt:
        ccol = jax.lax.broadcasted_iota(jnp.int32, (1, M), 1)
        ncol_pb = jax.lax.broadcasted_iota(jnp.int32, (1, N), 1)
        num_unique = jnp.sum((counts > 0.0).astype(jnp.float32),
                             axis=-1, keepdims=True)                        # [1, 1]
        replace = num_unique < jnp.float32(M)                               # [1, 1]
        cs = counts
        idx_pb = jnp.zeros((1, N), jnp.int32)
        for n in range(N):
            cmax = jnp.max(cs, axis=-1, keepdims=True)
            cam = jnp.min(jnp.where(cs == cmax, ccol, M), axis=-1, keepdims=True)
            idx_pb = jnp.where(ncol_pb == n, cam, idx_pb)
            cs = jnp.where(ccol == cam, neg_inf, cs)
        final_idx = jnp.where(replace, idx_pb, idx)                         # [B, N]

    # --- flatten final_idx [B, N] -> [B*N, 1] without an unsupported reshape:
    # a tiny 0/1 selection matmul replicates each row N times, then a lane
    # select picks column (r mod N). All index math stays in exact f32.
    rowb = jax.lax.broadcasted_iota(jnp.int32, (BN, B), 0)
    colb = jax.lax.broadcasted_iota(jnp.int32, (BN, B), 1)
    rsel = jnp.logical_and(rowb >= colb * N, rowb < (colb + 1) * N)   # r // N == b
    rsel_f = rsel.astype(jnp.float32)
    b_of_r = jnp.sum(rsel_f * colb.astype(jnp.float32),
                     axis=-1, keepdims=True)                                # [BN, 1]
    per_b = jnp.dot(rsel_f, final_idx.astype(jnp.float32),
                    preferred_element_type=jnp.float32)                     # [BN, N]
    ridx = jax.lax.broadcasted_iota(jnp.int32, (BN, 1), 0).astype(jnp.float32)
    n_of_r = ridx - jnp.float32(N) * b_of_r                                 # r mod N
    coln = jax.lax.broadcasted_iota(jnp.int32, (BN, N), 1).astype(jnp.float32)
    flat_f = jnp.sum(jnp.where(coln == n_of_r, per_b, 0.0),
                     axis=-1, keepdims=True)                                # [BN, 1]
    flat_idx = (flat_f + 0.5).astype(jnp.int32)                             # robust round

    # --- gather: one-hot [BN, M] @ pool [M, Lp*d] on the MXU, in the pool's
    # native dtype (bit-exact for a 0/1 weight matrix; no f32 emulation on v7x).
    colm = jax.lax.broadcasted_iota(jnp.int32, (BN, M), 1)
    onehot = colm == flat_idx                                               # [BN, M]
    out_ref[...] = jnp.dot(onehot.astype(pool.dtype), pool,
                           preferred_element_type=out_ref.dtype)            # [BN, Lp*d]

    # --- loss = sum_{b'} sum_{b,n} sim[b', final_idx[b,n]] / B^2
    #          = <column-sum(sim), selection-counts(final_idx)> / B^2
    colsum = jnp.sum(sim, axis=0, keepdims=True)                            # [1, M]
    countf = jnp.sum(onehot.astype(jnp.float32), axis=0, keepdims=True)     # [1, M]
    loss_ref[...] = (jnp.sum(colsum * countf, axis=-1, keepdims=True)
                     / jnp.float32(B * B))                                  # [1, 1]


def _fused_call(x, keys_normalized, pool2d, *, n_select, per_batch_prompt, out_dtype):
    B, pd = x.shape
    M, LD = pool2d.shape
    kernel = functools.partial(_prompt_pool_fused_kernel, n_select=n_select,
                               per_batch_prompt=per_batch_prompt)
    return pl.pallas_call(
        kernel,
        out_shape=(
            jax.ShapeDtypeStruct((B * n_select, LD), out_dtype),
            jax.ShapeDtypeStruct((1, 1), jnp.float32),
        ),
        in_specs=[
            pl.BlockSpec((B, pd), lambda: (0, 0)),
            pl.BlockSpec((M, pd), lambda: (0, 0)),
            pl.BlockSpec((M, LD), lambda: (0, 0)),
        ],
        out_specs=(
            pl.BlockSpec((B * n_select, LD), lambda: (0, 0)),
            pl.BlockSpec((1, 1), lambda: (0, 0)),
        ),
    )(x, keys_normalized, pool2d)


# ---------------------------------------------------------------------------
# Manual-indices path: tiny standalone one-hot gather kernel
# ---------------------------------------------------------------------------
def _gather_kernel(idx_ref, pool_ref, out_ref):
    idx = idx_ref[...]                                  # [BN, 1] int32
    pool = pool_ref[...]                                # [M, Lp*d]
    BN = idx.shape[0]
    M = pool.shape[0]
    col = jax.lax.broadcasted_iota(jnp.int32, (BN, M), 1)
    onehot = (col == idx).astype(pool.dtype)            # [BN, M]
    out_ref[...] = jnp.dot(onehot, pool, preferred_element_type=out_ref.dtype)


def _gather_prompts(pool2d, idx_flat):
    """pool2d: [M, Lp*d]; idx_flat: [B*N] int -> [B*N, Lp*d] (pool dtype)."""
    M, LD = pool2d.shape
    n_sel = idx_flat.shape[0]
    idx2d = idx_flat.reshape(n_sel, 1).astype(jnp.int32)
    return pl.pallas_call(
        _gather_kernel,
        out_shape=jax.ShapeDtypeStruct((n_sel, LD), pool2d.dtype),
        in_specs=[
            pl.BlockSpec((n_sel, 1), lambda: (0, 0)),
            pl.BlockSpec((M, LD), lambda: (0, 0)),
        ],
        out_specs=pl.BlockSpec((n_sel, LD), lambda: (0, 0)),
    )(idx2d, pool2d)


# ---------------------------------------------------------------------------
# Wrapper / module forward
# ---------------------------------------------------------------------------
def normalize_prompt_keys(prompt_keys):
    """L2-normalize prompt keys (torch F.normalize p=2, eps=1e-12 semantics).

    Keys are parameters: call this once outside the per-forward hot path and
    pass the result to `prompt_pool_forward`.
    """
    nrm = jnp.sqrt(jnp.sum(prompt_keys * prompt_keys, axis=-1, keepdims=True))
    return prompt_keys / jnp.maximum(nrm, jnp.float32(1e-12))


def prompt_pool_forward(x, prompt_pool, prompt_keys_normalized, *,
                        pool_selection_size, per_batch_prompt=True,
                        manual_prompt_indices=None):
    """L2P PromptPool forward.  Returns (selected_prompts [B, N*Lp, d], loss)."""
    B = x.shape[0]
    M, Lp, d = prompt_pool.shape
    pool2d = prompt_pool.reshape(M, Lp * d)     # contiguous, lane-dense slab

    if manual_prompt_indices is None:
        N = pool_selection_size
        prompts, loss = _fused_call(
            x, prompt_keys_normalized, pool2d,
            n_select=N, per_batch_prompt=per_batch_prompt,
            out_dtype=prompt_pool.dtype)
        loss_value = loss[0, 0]
    else:
        idx = manual_prompt_indices.astype(jnp.int32)
        N = idx.shape[1]
        prompts = _gather_prompts(pool2d, idx.reshape(-1))
        loss_value = jnp.float32(0.0)

    # [B*N, Lp*d] -> [B, N*Lp, d] is contiguous (== prompt_pool[idx].flatten(1, 2)).
    selected_prompts = prompts.reshape(B, N * Lp, d)
    return selected_prompts, loss_value


# ---------------------------------------------------------------------------
# Pure-JAX mirror of the torch module (verification only, runs eagerly)
# ---------------------------------------------------------------------------
def _reference_forward(x, prompt_pool, prompt_keys, n_select, per_batch_prompt):
    B = x.shape[0]
    M, Lp, d = prompt_pool.shape

    def _norm(v):
        return v / jnp.maximum(jnp.linalg.norm(v, axis=-1, keepdims=True), 1e-12)

    sim = _norm(x) @ _norm(prompt_keys).T                   # [B, M]
    _, idx = jax.lax.top_k(sim, n_select)                   # [B, N]
    if per_batch_prompt:
        ids = jnp.arange(M)
        cnt = jnp.zeros((M,), jnp.float32).at[idx.reshape(-1)].add(1.0)
        num_unique = int(jnp.sum(cnt > 0))
        if num_unique < M:
            order = jnp.argsort(jnp.where(cnt > 0, ids, ids + M))
            temp_pid = jnp.where(ids < num_unique, ids[order], jnp.min(idx))
            temp_idc = jnp.where(ids < num_unique, cnt[order], 0.0)
            _, major = jax.lax.top_k(temp_idc, n_select)
            idx = jnp.broadcast_to(temp_pid[major][None, :], (B, n_select))
    loss = jnp.take(sim, idx, axis=1).sum() / (B * B)
    sel = prompt_pool[idx].reshape(B, n_select * Lp, d)
    return sel, loss


# ---------------------------------------------------------------------------
if __name__ == "__main__":
    # Small shapes consistent with PromptPool defaults (scaled down).
    M, N, Lp = 10, 5, 5          # pool_size, pool_selection_size, prompt_size
    pd, d, B = 32, 32, 4         # prompt_key_dim, embedding_dim, batch

    key = jax.random.PRNGKey(0)
    k_pool, k_keys, k_x = jax.random.split(key, 3)
    prompt_pool = jax.random.uniform(k_pool, (M, Lp, d), minval=-1.0, maxval=1.0,
                                     dtype=jnp.float32)
    prompt_keys = jax.random.uniform(k_keys, (M, pd), minval=-1.0, maxval=1.0,
                                     dtype=jnp.float32)
    x = jax.random.normal(k_x, (B, pd), dtype=jnp.float32)

    # Keys are parameters: normalize once, outside the per-forward hot path.
    keys_n = normalize_prompt_keys(prompt_keys)

    selected_prompts, loss = prompt_pool_forward(
        x, prompt_pool, keys_n, pool_selection_size=N, per_batch_prompt=True)
    jax.block_until_ready((selected_prompts, loss))
    assert selected_prompts.shape == (B, N * Lp, d)
    assert selected_prompts.dtype == prompt_pool.dtype
    assert loss.shape == ()

    # Verify against a pure-JAX mirror of the torch module.
    ref_sel, ref_loss = _reference_forward(x, prompt_pool, prompt_keys, N, True)
    assert jnp.allclose(selected_prompts, ref_sel, atol=1e-5, rtol=1e-5)
    assert jnp.allclose(loss, ref_loss, atol=1e-4, rtol=1e-4)

    # Manual-indices path (separate tiny gather kernel; loss is exactly 0).
    man_idx = jnp.tile(jnp.arange(N, dtype=jnp.int32)[None, :], (B, 1))
    sel_m, loss_m = prompt_pool_forward(
        x, prompt_pool, keys_n, pool_selection_size=N, per_batch_prompt=True,
        manual_prompt_indices=man_idx)
    jax.block_until_ready((sel_m, loss_m))
    assert sel_m.shape == (B, N * Lp, d)
    expected_m = jnp.broadcast_to(prompt_pool[:N].reshape(1, N * Lp, d),
                                  (B, N * Lp, d))
    assert jnp.allclose(sel_m, expected_m, atol=1e-6, rtol=1e-6)

    print("KERNEL_OK")
</pallas_src>

<mosaic_0001>
module attributes {stable_mosaic.version = 11 : i64} {
  func.func @_prompt_pool_fused_kernel(%arg0: memref<4x32xf32, #tpu.memory_space<vmem>>, %arg1: memref<10x32xf32, #tpu.memory_space<vmem>>, %arg2: memref<10x160xf32, #tpu.memory_space<vmem>>, %arg3: memref<20x160xf32, #tpu.memory_space<vmem>>, %arg4: memref<1x1xf32, #tpu.memory_space<vmem>>) attributes {dimension_semantics = [], scalar_prefetch = 0 : i64, scratch_operands = 0 : i64, tpu.core_type = #tpu.core_type<tc>} {
    %c0 = arith.constant 0 : index
    %c0_0 = arith.constant 0 : index
    %0 = vector.load %arg0[%c0, %c0_0] : memref<4x32xf32, #tpu.memory_space<vmem>>, vector<4x32xf32>
    %c0_1 = arith.constant 0 : index
    %c0_2 = arith.constant 0 : index
    %1 = vector.load %arg1[%c0_1, %c0_2] : memref<10x32xf32, #tpu.memory_space<vmem>>, vector<10x32xf32>
    %c0_3 = arith.constant 0 : index
    %c0_4 = arith.constant 0 : index
    %2 = vector.load %arg2[%c0_3, %c0_4] : memref<10x160xf32, #tpu.memory_space<vmem>>, vector<10x160xf32>
    %3 = arith.mulf %0, %0 : vector<4x32xf32>
    %cst = arith.constant dense<0.000000e+00> : vector<4xf32>
    %4 = vector.multi_reduction <add>, %3, %cst [1] : vector<4x32xf32> to vector<4xf32>
    %5 = vector.shape_cast %4 : vector<4xf32> to vector<4x1xf32>
    %cst_5 = arith.constant 9.99999996E-13 : f32
    %cst_6 = arith.constant 9.99999996E-13 : f32
    %6 = arith.mulf %cst_5, %cst_6 : f32
    %7 = vector.broadcast %6 : f32 to vector<4x1xf32>
    %8 = arith.maximumf %5, %7 : vector<4x1xf32>
    %9 = math.rsqrt %8 : vector<4x1xf32>
    %10 = vector.broadcast %9 : vector<4x1xf32> to vector<4x32xf32>
    %11 = arith.mulf %0, %10 : vector<4x32xf32>
    %cst_7 = arith.constant dense<0.000000e+00> : vector<4x10xf32>
    %12 = tpu.matmul %11, %1, %cst_7 {dimension_numbers = #tpu.dot_dimension_numbers<[1], [1], [0], [0], [0, 0, 1, 0], [], []>} : vector<4x32xf32>, vector<10x32xf32>, vector<4x10xf32> -> vector<4x10xf32>
    %13 = tpu.iota {dimensions = array<i32: 1>} : vector<4x10xi32>
    %14 = tpu.iota {dimensions = array<i32: 1>} : vector<4x5xi32>
    %c0_i32 = arith.constant 0 : i32
    %15 = vector.broadcast %c0_i32 : i32 to vector<4x5xi32>
    %cst_8 = arith.constant 0.000000e+00 : f32
    %16 = vector.broadcast %cst_8 : f32 to vector<1x10xf32>
    %cst_9 = arith.constant dense<0xFF800000> : vector<4xf32>
    %17 = vector.multi_reduction <maximumf>, %12, %cst_9 [1] : vector<4x10xf32> to vector<4xf32>
    %18 = vector.shape_cast %17 : vector<4xf32> to vector<4x1xf32>
    %19 = vector.broadcast %18 : vector<4x1xf32> to vector<4x10xf32>
    %20 = arith.cmpf oeq, %12, %19 : vector<4x10xf32>
    %c10_i32 = arith.constant 10 : i32
    %21 = vector.broadcast %c10_i32 : i32 to vector<4x10xi32>
    %22 = arith.select %20, %13, %21 : vector<4x10xi1>, vector<4x10xi32>
    %cst_10 = arith.constant dense<2147483647> : vector<4xi32>
    %23 = vector.multi_reduction <minsi>, %22, %cst_10 [1] : vector<4x10xi32> to vector<4xi32>
    %24 = vector.shape_cast %23 : vector<4xi32> to vector<4x1xi32>
    %c0_i32_11 = arith.constant 0 : i32
    %25 = vector.broadcast %c0_i32_11 : i32 to vector<4x5xi32>
    %26 = arith.cmpi eq, %14, %25 : vector<4x5xi32>
    %27 = vector.shape_cast %24 : vector<4x1xi32> to vector<4x1xi32>
    %28 = vector.broadcast %27 : vector<4x1xi32> to vector<4x5xi32>
    %29 = arith.select %26, %28, %15 : vector<4x5xi1>, vector<4x5xi32>
    %30 = vector.broadcast %24 : vector<4x1xi32> to vector<4x10xi32>
    %31 = arith.cmpi eq, %13, %30 : vector<4x10xi32>
    %32 = arith.extui %31 : vector<4x10xi1> to vector<4x10xi32>
    %33 = arith.sitofp %32 : vector<4x10xi32> to vector<4x10xf32>
    %cst_12 = arith.constant dense<0.000000e+00> : vector<10xf32>
    %34 = vector.multi_reduction <add>, %33, %cst_12 [0] : vector<4x10xf32> to vector<10xf32>
    %35 = vector.shape_cast %34 : vector<10xf32> to vector<1x10xf32>
    %36 = arith.addf %16, %35 : vector<1x10xf32>
    %37 = vector.broadcast %24 : vector<4x1xi32> to vector<4x10xi32>
    %38 = arith.cmpi eq, %13, %37 : vector<4x10xi32>
    %cst_13 = arith.constant 0xFF800000 : f32
    %39 = vector.broadcast %cst_13 : f32 to vector<4x10xf32>
    %40 = arith.select %38, %39, %12 : vector<4x10xi1>, vector<4x10xf32>
    %cst_14 = arith.constant dense<0xFF800000> : vector<4xf32>
    %41 = vector.multi_reduction <maximumf>, %40, %cst_14 [1] : vector<4x10xf32> to vector<4xf32>
    %42 = vector.shape_cast %41 : vector<4xf32> to vector<4x1xf32>
    %43 = vector.broadcast %42 : vector<4x1xf32> to vector<4x10xf32>
    %44 = arith.cmpf oeq, %40, %43 : vector<4x10xf32>
    %c10_i32_15 = arith.constant 10 : i32
    %45 = vector.broadcast %c10_i32_15 : i32 to vector<4x10xi32>
    %46 = arith.select %44, %13, %45 : vector<4x10xi1>, vector<4x10xi32>
    %cst_16 = arith.constant dense<2147483647> : vector<4xi32>
    %47 = vector.multi_reduction <minsi>, %46, %cst_16 [1] : vector<4x10xi32> to vector<4xi32>
    %48 = vector.shape_cast %47 : vector<4xi32> to vector<4x1xi32>
    %c1_i32 = arith.constant 1 : i32
    %49 = vector.broadcast %c1_i32 : i32 to vector<4x5xi32>
    %50 = arith.cmpi eq, %14, %49 : vector<4x5xi32>
    %51 = vector.shape_cast %48 : vector<4x1xi32> to vector<4x1xi32>
    %52 = vector.broadcast %51 : vector<4x1xi32> to vector<4x5xi32>
    %53 = arith.select %50, %52, %29 : vector<4x5xi1>, vector<4x5xi32>
    %54 = vector.broadcast %48 : vector<4x1xi32> to vector<4x10xi32>
    %55 = arith.cmpi eq, %13, %54 : vector<4x10xi32>
    %56 = arith.extui %55 : vector<4x10xi1> to vector<4x10xi32>
    %57 = arith.sitofp %56 : vector<4x10xi32> to vector<4x10xf32>
    %cst_17 = arith.constant dense<0.000000e+00> : vector<10xf32>
    %58 = vector.multi_reduction <add>, %57, %cst_17 [0] : vector<4x10xf32> to vector<10xf32>
    %59 = vector.shape_cast %58 : vector<10xf32> to vector<1x10xf32>
    %60 = arith.addf %36, %59 : vector<1x10xf32>
    %61 = vector.broadcast %48 : vector<4x1xi32> to vector<4x10xi32>
    %62 = arith.cmpi eq, %13, %61 : vector<4x10xi32>
    %cst_18 = arith.constant 0xFF800000 : f32
    %63 = vector.broadcast %cst_18 : f32 to vector<4x10xf32>
    %64 = arith.select %62, %63, %40 : vector<4x10xi1>, vector<4x10xf32>
    %cst_19 = arith.constant dense<0xFF800000> : vector<4xf32>
    %65 = vector.multi_reduction <maximumf>, %64, %cst_19 [1] : vector<4x10xf32> to vector<4xf32>
    %66 = vector.shape_cast %65 : vector<4xf32> to vector<4x1xf32>
    %67 = vector.broadcast %66 : vector<4x1xf32> to vector<4x10xf32>
    %68 = arith.cmpf oeq, %64, %67 : vector<4x10xf32>
    %c10_i32_20 = arith.constant 10 : i32
    %69 = vector.broadcast %c10_i32_20 : i32 to vector<4x10xi32>
    %70 = arith.select %68, %13, %69 : vector<4x10xi1>, vector<4x10xi32>
    %cst_21 = arith.constant dense<2147483647> : vector<4xi32>
    %71 = vector.multi_reduction <minsi>, %70, %cst_21 [1] : vector<4x10xi32> to vector<4xi32>
    %72 = vector.shape_cast %71 : vector<4xi32> to vector<4x1xi32>
    %c2_i32 = arith.constant 2 : i32
    %73 = vector.broadcast %c2_i32 : i32 to vector<4x5xi32>
    %74 = arith.cmpi eq, %14, %73 : vector<4x5xi32>
    %75 = vector.shape_cast %72 : vector<4x1xi32> to vector<4x1xi32>
    %76 = vector.broadcast %75 : vector<4x1xi32> to vector<4x5xi32>
    %77 = arith.select %74, %76, %53 : vector<4x5xi1>, vector<4x5xi32>
    %78 = vector.broadcast %72 : vector<4x1xi32> to vector<4x10xi32>
    %79 = arith.cmpi eq, %13, %78 : vector<4x10xi32>
    %80 = arith.extui %79 : vector<4x10xi1> to vector<4x10xi32>
    %81 = arith.sitofp %80 : vector<4x10xi32> to vector<4x10xf32>
    %cst_22 = arith.constant dense<0.000000e+00> : vector<10xf32>
    %82 = vector.multi_reduction <add>, %81, %cst_22 [0] : vector<4x10xf32> to vector<10xf32>
    %83 = vector.shape_cast %82 : vector<10xf32> to vector<1x10xf32>
    %84 = arith.addf %60, %83 : vector<1x10xf32>
    %85 = vector.broadcast %72 : vector<4x1xi32> to vector<4x10xi32>
    %86 = arith.cmpi eq, %13, %85 : vector<4x10xi32>
    %cst_23 = arith.constant 0xFF800000 : f32
    %87 = vector.broadcast %cst_23 : f32 to vector<4x10xf32>
    %88 = arith.select %86, %87, %64 : vector<4x10xi1>, vector<4x10xf32>
    %cst_24 = arith.constant dense<0xFF800000> : vector<4xf32>
    %89 = vector.multi_reduction <maximumf>, %88, %cst_24 [1] : vector<4x10xf32> to vector<4xf32>
    %90 = vector.shape_cast %89 : vector<4xf32> to vector<4x1xf32>
    %91 = vector.broadcast %90 : vector<4x1xf32> to vector<4x10xf32>
    %92 = arith.cmpf oeq, %88, %91 : vector<4x10xf32>
    %c10_i32_25 = arith.constant 10 : i32
    %93 = vector.broadcast %c10_i32_25 : i32 to vector<4x10xi32>
    %94 = arith.select %92, %13, %93 : vector<4x10xi1>, vector<4x10xi32>
    %cst_26 = arith.constant dense<2147483647> : vector<4xi32>
    %95 = vector.multi_reduction <minsi>, %94, %cst_26 [1] : vector<4x10xi32> to vector<4xi32>
    %96 = vector.shape_cast %95 : vector<4xi32> to vector<4x1xi32>
    %c3_i32 = arith.constant 3 : i32
    %97 = vector.broadcast %c3_i32 : i32 to vector<4x5xi32>
    %98 = arith.cmpi eq, %14, %97 : vector<4x5xi32>
    %99 = vector.shape_cast %96 : vector<4x1xi32> to vector<4x1xi32>
    %100 = vector.broadcast %99 : vector<4x1xi32> to vector<4x5xi32>
    %101 = arith.select %98, %100, %77 : vector<4x5xi1>, vector<4x5xi32>
    %102 = vector.broadcast %96 : vector<4x1xi32> to vector<4x10xi32>
    %103 = arith.cmpi eq, %13, %102 : vector<4x10xi32>
    %104 = arith.extui %103 : vector<4x10xi1> to vector<4x10xi32>
    %105 = arith.sitofp %104 : vector<4x10xi32> to vector<4x10xf32>
    %cst_27 = arith.constant dense<0.000000e+00> : vector<10xf32>
    %106 = vector.multi_reduction <add>, %105, %cst_27 [0] : vector<4x10xf32> to vector<10xf32>
    %107 = vector.shape_cast %106 : vector<10xf32> to vector<1x10xf32>
    %108 = arith.addf %84, %107 : vector<1x10xf32>
    %109 = vector.broadcast %96 : vector<4x1xi32> to vector<4x10xi32>
    %110 = arith.cmpi eq, %13, %109 : vector<4x10xi32>
    %cst_28 = arith.constant 0xFF800000 : f32
    %111 = vector.broadcast %cst_28 : f32 to vector<4x10xf32>
    %112 = arith.select %110, %111, %88 : vector<4x10xi1>, vector<4x10xf32>
    %cst_29 = arith.constant dense<0xFF800000> : vector<4xf32>
    %113 = vector.multi_reduction <maximumf>, %112, %cst_29 [1] : vector<4x10xf32> to vector<4xf32>
    %114 = vector.shape_cast %113 : vector<4xf32> to vector<4x1xf32>
    %115 = vector.broadcast %114 : vector<4x1xf32> to vector<4x10xf32>
    %116 = arith.cmpf oeq, %112, %115 : vector<4x10xf32>
    %c10_i32_30 = arith.constant 10 : i32
    %117 = vector.broadcast %c10_i32_30 : i32 to vector<4x10xi32>
    %118 = arith.select %116, %13, %117 : vector<4x10xi1>, vector<4x10xi32>
    %cst_31 = arith.constant dense<2147483647> : vector<4xi32>
    %119 = vector.multi_reduction <minsi>, %118, %cst_31 [1] : vector<4x10xi32> to vector<4xi32>
    %120 = vector.shape_cast %119 : vector<4xi32> to vector<4x1xi32>
    %c4_i32 = arith.constant 4 : i32
    %121 = vector.broadcast %c4_i32 : i32 to vector<4x5xi32>
    %122 = arith.cmpi eq, %14, %121 : vector<4x5xi32>
    %123 = vector.shape_cast %120 : vector<4x1xi32> to vector<4x1xi32>
    %124 = vector.broadcast %123 : vector<4x1xi32> to vector<4x5xi32>
    %125 = arith.select %122, %124, %101 : vector<4x5xi1>, vector<4x5xi32>
    %126 = vector.broadcast %120 : vector<4x1xi32> to vector<4x10xi32>
    %127 = arith.cmpi eq, %13, %126 : vector<4x10xi32>
    %128 = arith.extui %127 : vector<4x10xi1> to vector<4x10xi32>
    %129 = arith.sitofp %128 : vector<4x10xi32> to vector<4x10xf32>
    %cst_32 = arith.constant dense<0.000000e+00> : vector<10xf32>
    %130 = vector.multi_reduction <add>, %129, %cst_32 [0] : vector<4x10xf32> to vector<10xf32>
    %131 = vector.shape_cast %130 : vector<10xf32> to vector<1x10xf32>
    %132 = arith.addf %108, %131 : vector<1x10xf32>
    %133 = tpu.iota {dimensions = array<i32: 1>} : vector<1x10xi32>
    %134 = tpu.iota {dimensions = array<i32: 1>} : vector<1x5xi32>
    %cst_33 = arith.constant 0.000000e+00 : f32
    %135 = vector.broadcast %cst_33 : f32 to vector<1x10xf32>
    %136 = arith.cmpf ogt, %132, %135 : vector<1x10xf32>
    %137 = arith.extui %136 : vector<1x10xi1> to vector<1x10xi32>
    %138 = arith.sitofp %137 : vector<1x10xi32> to vector<1x10xf32>
    %cst_34 = arith.constant dense<0.000000e+00> : vector<1xf32>
    %139 = vector.multi_reduction <add>, %138, %cst_34 [1] : vector<1x10xf32> to vector<1xf32>
    %140 = vector.shape_cast %139 : vector<1xf32> to vector<1x1xf32>
    %cst_35 = arith.constant 1.000000e+01 : f32
    %141 = vector.broadcast %cst_35 : f32 to vector<1x1xf32>
    %142 = arith.cmpf olt, %140, %141 : vector<1x1xf32>
    %c0_i32_36 = arith.constant 0 : i32
    %143 = vector.broadcast %c0_i32_36 : i32 to vector<1x5xi32>
    %cst_37 = arith.constant dense<0xFF800000> : vector<1xf32>
    %144 = vector.multi_reduction <maximumf>, %132, %cst_37 [1] : vector<1x10xf32> to vector<1xf32>
    %145 = vector.shape_cast %144 : vector<1xf32> to vector<1x1xf32>
    %146 = vector.broadcast %145 : vector<1x1xf32> to vector<1x10xf32>
    %147 = arith.cmpf oeq, %132, %146 : vector<1x10xf32>
    %c10_i32_38 = arith.constant 10 : i32
    %148 = vector.broadcast %c10_i32_38 : i32 to vector<1x10xi32>
    %149 = arith.select %147, %133, %148 : vector<1x10xi1>, vector<1x10xi32>
    %cst_39 = arith.constant dense<2147483647> : vector<1xi32>
    %150 = vector.multi_reduction <minsi>, %149, %cst_39 [1] : vector<1x10xi32> to vector<1xi32>
    %151 = vector.shape_cast %150 : vector<1xi32> to vector<1x1xi32>
    %c0_i32_40 = arith.constant 0 : i32
    %152 = vector.broadcast %c0_i32_40 : i32 to vector<1x5xi32>
    %153 = arith.cmpi eq, %134, %152 : vector<1x5xi32>
    %154 = vector.shape_cast %151 : vector<1x1xi32> to vector<1x1xi32>
    %155 = vector.broadcast %154 : vector<1x1xi32> to vector<1x5xi32>
    %156 = arith.select %153, %155, %143 : vector<1x5xi1>, vector<1x5xi32>
    %157 = vector.broadcast %151 : vector<1x1xi32> to vector<1x10xi32>
    %158 = arith.cmpi eq, %133, %157 : vector<1x10xi32>
    %cst_41 = arith.constant 0xFF800000 : f32
    %159 = vector.broadcast %cst_41 : f32 to vector<1x10xf32>
    %160 = arith.select %158, %159, %132 : vector<1x10xi1>, vector<1x10xf32>
    %cst_42 = arith.constant dense<0xFF800000> : vector<1xf32>
    %161 = vector.multi_reduction <maximumf>, %160, %cst_42 [1] : vector<1x10xf32> to vector<1xf32>
    %162 = vector.shape_cast %161 : vector<1xf32> to vector<1x1xf32>
    %163 = vector.broadcast %162 : vector<1x1xf32> to vector<1x10xf32>
    %164 = arith.cmpf oeq, %160, %163 : vector<1x10xf32>
    %c10_i32_43 = arith.constant 10 : i32
    %165 = vector.broadcast %c10_i32_43 : i32 to vector<1x10xi32>
    %166 = arith.select %164, %133, %165 : vector<1x10xi1>, vector<1x10xi32>
    %cst_44 = arith.constant dense<2147483647> : vector<1xi32>
    %167 = vector.multi_reduction <minsi>, %166, %cst_44 [1] : vector<1x10xi32> to vector<1xi32>
    %168 = vector.shape_cast %167 : vector<1xi32> to vector<1x1xi32>
    %c1_i32_45 = arith.constant 1 : i32
    %169 = vector.broadcast %c1_i32_45 : i32 to vector<1x5xi32>
    %170 = arith.cmpi eq, %134, %169 : vector<1x5xi32>
    %171 = vector.shape_cast %168 : vector<1x1xi32> to vector<1x1xi32>
    %172 = vector.broadcast %171 : vector<1x1xi32> to vector<1x5xi32>
    %173 = arith.select %170, %172, %156 : vector<1x5xi1>, vector<1x5xi32>
    %174 = vector.broadcast %168 : vector<1x1xi32> to vector<1x10xi32>
    %175 = arith.cmpi eq, %133, %174 : vector<1x10xi32>
    %cst_46 = arith.constant 0xFF800000 : f32
    %176 = vector.broadcast %cst_46 : f32 to vector<1x10xf32>
    %177 = arith.select %175, %176, %160 : vector<1x10xi1>, vector<1x10xf32>
    %cst_47 = arith.constant dense<0xFF800000> : vector<1xf32>
    %178 = vector.multi_reduction <maximumf>, %177, %cst_47 [1] : vector<1x10xf32> to vector<1xf32>
    %179 = vector.shape_cast %178 : vector<1xf32> to vector<1x1xf32>
    %180 = vector.broadcast %179 : vector<1x1xf32> to vector<1x10xf32>
    %181 = arith.cmpf oeq, %177, %180 : vector<1x10xf32>
    %c10_i32_48 = arith.constant 10 : i32
    %182 = vector.broadcast %c10_i32_48 : i32 to vector<1x10xi32>
    %183 = arith.select %181, %133, %182 : vector<1x10xi1>, vector<1x10xi32>
    %cst_49 = arith.constant dense<2147483647> : vector<1xi32>
    %184 = vector.multi_reduction <minsi>, %183, %cst_49 [1] : vector<1x10xi32> to vector<1xi32>
    %185 = vector.shape_cast %184 : vector<1xi32> to vector<1x1xi32>
    %c2_i32_50 = arith.constant 2 : i32
    %186 = vector.broadcast %c2_i32_50 : i32 to vector<1x5xi32>
    %187 = arith.cmpi eq, %134, %186 : vector<1x5xi32>
    %188 = vector.shape_cast %185 : vector<1x1xi32> to vector<1x1xi32>
    %189 = vector.broadcast %188 : vector<1x1xi32> to vector<1x5xi32>
    %190 = arith.select %187, %189, %173 : vector<1x5xi1>, vector<1x5xi32>
    %191 = vector.broadcast %185 : vector<1x1xi32> to vector<1x10xi32>
    %192 = arith.cmpi eq, %133, %191 : vector<1x10xi32>
    %cst_51 = arith.constant 0xFF800000 : f32
    %193 = vector.broadcast %cst_51 : f32 to vector<1x10xf32>
    %194 = arith.select %192, %193, %177 : vector<1x10xi1>, vector<1x10xf32>
    %cst_52 = arith.constant dense<0xFF800000> : vector<1xf32>
    %195 = vector.multi_reduction <maximumf>, %194, %cst_52 [1] : vector<1x10xf32> to vector<1xf32>
    %196 = vector.shape_cast %195 : vector<1xf32> to vector<1x1xf32>
    %197 = vector.broadcast %196 : vector<1x1xf32> to vector<1x10xf32>
    %198 = arith.cmpf oeq, %194, %197 : vector<1x10xf32>
    %c10_i32_53 = arith.constant 10 : i32
    %199 = vector.broadcast %c10_i32_53 : i32 to vector<1x10xi32>
    %200 = arith.select %198, %133, %199 : vector<1x10xi1>, vector<1x10xi32>
    %cst_54 = arith.constant dense<2147483647> : vector<1xi32>
    %201 = vector.multi_reduction <minsi>, %200, %cst_54 [1] : vector<1x10xi32> to vector<1xi32>
    %202 = vector.shape_cast %201 : vector<1xi32> to vector<1x1xi32>
    %c3_i32_55 = arith.constant 3 : i32
    %203 = vector.broadcast %c3_i32_55 : i32 to vector<1x5xi32>
    %204 = arith.cmpi eq, %134, %203 : vector<1x5xi32>
    %205 = vector.shape_cast %202 : vector<1x1xi32> to vector<1x1xi32>
    %206 = vector.broadcast %205 : vector<1x1xi32> to vector<1x5xi32>
    %207 = arith.select %204, %206, %190 : vector<1x5xi1>, vector<1x5xi32>
    %208 = vector.broadcast %202 : vector<1x1xi32> to vector<1x10xi32>
    %209 = arith.cmpi eq, %133, %208 : vector<1x10xi32>
    %cst_56 = arith.constant 0xFF800000 : f32
    %210 = vector.broadcast %cst_56 : f32 to vector<1x10xf32>
    %211 = arith.select %209, %210, %194 : vector<1x10xi1>, vector<1x10xf32>
    %cst_57 = arith.constant dense<0xFF800000> : vector<1xf32>
    %212 = vector.multi_reduction <maximumf>, %211, %cst_57 [1] : vector<1x10xf32> to vector<1xf32>
    %213 = vector.shape_cast %212 : vector<1xf32> to vector<1x1xf32>
    %214 = vector.broadcast %213 : vector<1x1xf32> to vector<1x10xf32>
    %215 = arith.cmpf oeq, %211, %214 : vector<1x10xf32>
    %c10_i32_58 = arith.constant 10 : i32
    %216 = vector.broadcast %c10_i32_58 : i32 to vector<1x10xi32>
    %217 = arith.select %215, %133, %216 : vector<1x10xi1>, vector<1x10xi32>
    %cst_59 = arith.constant dense<2147483647> : vector<1xi32>
    %218 = vector.multi_reduction <minsi>, %217, %cst_59 [1] : vector<1x10xi32> to vector<1xi32>
    %219 = vector.shape_cast %218 : vector<1xi32> to vector<1x1xi32>
    %c4_i32_60 = arith.constant 4 : i32
    %220 = vector.broadcast %c4_i32_60 : i32 to vector<1x5xi32>
    %221 = arith.cmpi eq, %134, %220 : vector<1x5xi32>
    %222 = vector.shape_cast %219 : vector<1x1xi32> to vector<1x1xi32>
    %223 = vector.broadcast %222 : vector<1x1xi32> to vector<1x5xi32>
    %224 = arith.select %221, %223, %207 : vector<1x5xi1>, vector<1x5xi32>
    %225 = vector.shape_cast %142 : vector<1x1xi1> to vector<1x1xi1>
    %226 = vector.broadcast %225 : vector<1x1xi1> to vector<4x5xi1>
    %227 = vector.shape_cast %224 : vector<1x5xi32> to vector<1x5xi32>
    %228 = vector.broadcast %227 : vector<1x5xi32> to vector<4x5xi32>
    %229 = arith.select %226, %228, %125 : vector<4x5xi1>, vector<4x5xi32>
    %230 = tpu.iota {dimensions = array<i32: 0>} : vector<20x4xi32>
    %231 = tpu.iota {dimensions = array<i32: 1>} : vector<20x4xi32>
    %c5_i32 = arith.constant 5 : i32
    %232 = vector.broadcast %c5_i32 : i32 to vector<20x4xi32>
    %233 = arith.muli %231, %232 : vector<20x4xi32>
    %234 = arith.cmpi sge, %230, %233 : vector<20x4xi32>
    %c1_i32_61 = arith.constant 1 : i32
    %235 = vector.broadcast %c1_i32_61 : i32 to vector<20x4xi32>
    %236 = arith.addi %231, %235 : vector<20x4xi32>
    %c5_i32_62 = arith.constant 5 : i32
    %237 = vector.broadcast %c5_i32_62 : i32 to vector<20x4xi32>
    %238 = arith.muli %236, %237 : vector<20x4xi32>
    %239 = arith.cmpi slt, %230, %238 : vector<20x4xi32>
    %240 = arith.andi %234, %239 : vector<20x4xi1>
    %241 = arith.extui %240 : vector<20x4xi1> to vector<20x4xi32>
    %242 = arith.sitofp %241 : vector<20x4xi32> to vector<20x4xf32>
    %243 = arith.sitofp %231 : vector<20x4xi32> to vector<20x4xf32>
    %244 = arith.mulf %242, %243 : vector<20x4xf32>
    %cst_63 = arith.constant dense<0.000000e+00> : vector<20xf32>
    %245 = vector.multi_reduction <add>, %244, %cst_63 [1] : vector<20x4xf32> to vector<20xf32>
    %246 = vector.shape_cast %245 : vector<20xf32> to vector<20x1xf32>
    %247 = arith.sitofp %229 : vector<4x5xi32> to vector<4x5xf32>
    %cst_64 = arith.constant dense<0.000000e+00> : vector<20x5xf32>
    %248 = tpu.matmul %242, %247, %cst_64 {dimension_numbers = #tpu.dot_dimension_numbers<[1], [0], [0], [1], [0, 0, 1, 1], [], []>} : vector<20x4xf32>, vector<4x5xf32>, vector<20x5xf32> -> vector<20x5xf32>
    %249 = tpu.iota {dimensions = array<i32: 0>} : vector<20x1xi32>
    %250 = arith.sitofp %249 : vector<20x1xi32> to vector<20x1xf32>
    %cst_65 = arith.constant 5.000000e+00 : f32
    %251 = vector.broadcast %cst_65 : f32 to vector<20x1xf32>
    %252 = arith.mulf %251, %246 : vector<20x1xf32>
    %253 = arith.subf %250, %252 : vector<20x1xf32>
    %254 = tpu.iota {dimensions = array<i32: 1>} : vector<20x5xi32>
    %255 = arith.sitofp %254 : vector<20x5xi32> to vector<20x5xf32>
    %256 = vector.broadcast %253 : vector<20x1xf32> to vector<20x5xf32>
    %257 = arith.cmpf oeq, %255, %256 : vector<20x5xf32>
    %cst_66 = arith.constant 0.000000e+00 : f32
    %258 = vector.broadcast %cst_66 : f32 to vector<20x5xf32>
    %259 = arith.select %257, %248, %258 : vector<20x5xi1>, vector<20x5xf32>
    %cst_67 = arith.constant dense<0.000000e+00> : vector<20xf32>
    %260 = vector.multi_reduction <add>, %259, %cst_67 [1] : vector<20x5xf32> to vector<20xf32>
    %261 = vector.shape_cast %260 : vector<20xf32> to vector<20x1xf32>
    %cst_68 = arith.constant 5.000000e-01 : f32
    %262 = vector.broadcast %cst_68 : f32 to vector<20x1xf32>
    %263 = arith.addf %261, %262 : vector<20x1xf32>
    %264 = arith.fptosi %263 : vector<20x1xf32> to vector<20x1xi32>
    %265 = tpu.iota {dimensions = array<i32: 1>} : vector<20x10xi32>
    %266 = vector.broadcast %264 : vector<20x1xi32> to vector<20x10xi32>
    %267 = arith.cmpi eq, %265, %266 : vector<20x10xi32>
    %268 = arith.extui %267 : vector<20x10xi1> to vector<20x10xi32>
    %269 = arith.sitofp %268 : vector<20x10xi32> to vector<20x10xf32>
    %cst_69 = arith.constant dense<0.000000e+00> : vector<20x160xf32>
    %270 = tpu.matmul %269, %2, %cst_69 {dimension_numbers = #tpu.dot_dimension_numbers<[1], [0], [0], [1], [0, 0, 1, 1], [], []>} : vector<20x10xf32>, vector<10x160xf32>, vector<20x160xf32> -> vector<20x160xf32>
    %c0_70 = arith.constant 0 : index
    %c0_71 = arith.constant 0 : index
    %271 = vector.load %arg3[%c0_70, %c0_71] : memref<20x160xf32, #tpu.memory_space<vmem>>, vector<20x160xf32>
    tpu.vector_store %arg3[%c0_70, %c0_71], %270 {strides = array<i32>} : memref<20x160xf32, #tpu.memory_space<vmem>>, vector<20x160xf32>,
    %cst_72 = arith.constant dense<0.000000e+00> : vector<10xf32>
    %272 = vector.multi_reduction <add>, %12, %cst_72 [0] : vector<4x10xf32> to vector<10xf32>
    %273 = vector.shape_cast %272 : vector<10xf32> to vector<1x10xf32>
    %274 = arith.extui %267 : vector<20x10xi1> to vector<20x10xi32>
    %275 = arith.sitofp %274 : vector<20x10xi32> to vector<20x10xf32>
    %cst_73 = arith.constant dense<0.000000e+00> : vector<10xf32>
    %276 = vector.multi_reduction <add>, %275, %cst_73 [0] : vector<20x10xf32> to vector<10xf32>
    %277 = vector.shape_cast %276 : vector<10xf32> to vector<1x10xf32>
    %278 = arith.mulf %273, %277 : vector<1x10xf32>
    %cst_74 = arith.constant dense<0.000000e+00> : vector<1xf32>
    %279 = vector.multi_reduction <add>, %278, %cst_74 [1] : vector<1x10xf32> to vector<1xf32>
    %280 = vector.shape_cast %279 : vector<1xf32> to vector<1x1xf32>
    %cst_75 = arith.constant 1.600000e+01 : f32
    %281 = vector.broadcast %cst_75 : f32 to vector<1x1xf32>
    %282 = arith.divf %280, %281 : vector<1x1xf32>
    %c0_76 = arith.constant 0 : index
    %c0_77 = arith.constant 0 : index
    %283 = vector.load %arg4[%c0_76, %c0_77] : memref<1x1xf32, #tpu.memory_space<vmem>>, vector<1x1xf32>
    tpu.vector_store %arg4[%c0_76, %c0_77], %282 {strides = array<i32>} : memref<1x1xf32, #tpu.memory_space<vmem>>, vector<1x1xf32>,
    return
  }
}

</mosaic_0001>

<llo_original>
// kernel: tpu_custom_call.1
$region0: #{tpu_custom_call.1}
  #allocation0 [shape = 'u32[]', space=smem, size = 0x4, offset = 0x4, fixed_abs, tag = 'smem constant byte address 0x4 - core index']
  #allocation1 [shape = 'u32[144,128]{1,0:T(1,128)}', space=vmem, size = 0x12000, scoped, tag = 'internal scratch']
  %s0 = inlined_call_operand.hbm [shape: f32[4,32], index: 0, kind: input, shape index: {}]
  %s1 = inlined_call_operand.hbm [shape: f32[10,32], index: 1, kind: input, shape index: {}]
  %s2 = inlined_call_operand.hbm [shape: f32[10,160], index: 2, kind: input, shape index: {}]
  %s3 = inlined_call_operand.hbm [shape: f32[20,160], index: 3, kind: output, shape index: {0}]
  %s4 = inlined_call_operand.hbm [shape: f32[1,1], index: 4, kind: output, shape index: {1}]
  %5 = xla_tuple %s3, %s4
  %s6 = sld [smem:[#allocation0]]
  $region42: #{tpu_custom_call.1} parent=0
    _
  %s8 = ssub.s32 1, %s6
  %s9 = scalar_select 0, %s8, %s6
  $region1: #{tpu_custom_call.1} parent=0
    #allocation2 [shape = 'u8[2048]{0}', space=vmem, size = 0x800, scoped, tag = 'input window, operand 0, single buffered']
    #allocation3 [shape = 's32[1]{0}', space=sflag, size = 0x4, scoped, tag = 'scoped memory for tpu_custom_call.1']
    #allocation4 [shape = 's32[1]{0}', space=sflag, size = 0x4, scoped, tag = 'scoped memory for tpu_custom_call.1']
    #allocation5 [shape = 'u8[8192]{0}', space=vmem, size = 0x2000, scoped, tag = 'input window, operand 1, single buffered']
    #allocation6 [shape = 's32[1]{0}', space=sflag, size = 0x4, scoped, tag = 'scoped memory for tpu_custom_call.1']
    #allocation7 [shape = 'u8[16384]{0}', space=vmem, size = 0x4000, scoped, tag = 'input window, operand 2, single buffered']
    #allocation8 [shape = 'u8[24576]{0}', space=vmem, size = 0x6000, scoped, tag = 'output window, operand 0, single buffered']
    #allocation9 [shape = 'u8[512]{0}', space=vmem, size = 0x400, scoped, tag = 'output window, operand 1, single buffered']
    #allocation10 [shape = 's32[1]{0}', space=sflag, size = 0x4, scoped, tag = 'scoped memory for tpu_custom_call.1']
    %10 = vsyncpa [#allocation3], 0
    %11 = vsyncpa [#allocation6], 0
    %12 = vsyncpa [#allocation4], 0
    %13 = vsyncpa [#allocation10], 0
    // Predicated region
    $region2: #{tpu_custom_call.1} parent=1 // pred_check
      _
    $region3: #{tpu_custom_call.1} parent=1 // pred_check_branch
      %15 = sbr.rel (0) target = $region5
    $region4: #{tpu_custom_call.1} parent=1 // pred_region
      %s17 = ssub.s32 64, 64
      %18 = vsyncadd [#allocation3], %s17
      %s20 = sshll.u32 [#allocation2], 4
      %s21 = int_to_ptr.vmem [resolvable:$true] %s20
      %23 = dma.hbm_to_vmem [thread:$0]  %s0, 64, %s21, [#allocation3]
    $region5: #{tpu_custom_call.1} parent=1 // pred_fallthru
      _
    // Predicated region
    $region6: #{tpu_custom_call.1} parent=1 // pred_check
      _
    $region7: #{tpu_custom_call.1} parent=1 // pred_check_branch
      %25 = sbr.rel (0) target = $region9
    $region8: #{tpu_custom_call.1} parent=1 // pred_region
      %s27 = ssub.s32 256, 256
      %28 = vsyncadd [#allocation6], %s27
      %s29 = sshll.u32 [#allocation5], 4
      %s30 = int_to_ptr.vmem [resolvable:$true] %s29
      %35 = dma.hbm_to_vmem [thread:$0]  %s1, 256, %s30, [#allocation6], 128, 128, 8
    $region9: #{tpu_custom_call.1} parent=1 // pred_fallthru
      _
    // Predicated region
    $region10: #{tpu_custom_call.1} parent=1 // pred_check
      _
    $region11: #{tpu_custom_call.1} parent=1 // pred_check_branch
      %37 = sbr.rel (0) target = $region13
    $region12: #{tpu_custom_call.1} parent=1 // pred_region
      %s39 = ssub.s32 512, 512
      %40 = vsyncadd [#allocation6], %s39
      %s41 = sshll.u32 [#allocation7], 4
      %s42 = int_to_ptr.vmem [resolvable:$true] %s41
      %47 = dma.hbm_to_vmem [thread:$0]  %s2, 512, %s42, [#allocation6], 256, 256, 16
    $region13: #{tpu_custom_call.1} parent=1 // pred_fallthru
      _
    // Predicated region
    $region14: #{tpu_custom_call.1} parent=1 // pred_check
      _
    $region15: #{tpu_custom_call.1} parent=1 // pred_check_branch
      %49 = sbr.rel (0) target = $region17
    $region16: #{tpu_custom_call.1} parent=1 // pred_region
      %50 = dma.done [#allocation3], 64
    $region17: #{tpu_custom_call.1} parent=1 // pred_fallthru
      _
    // Predicated region
    $region18: #{tpu_custom_call.1} parent=1 // pred_check
      _
    $region19: #{tpu_custom_call.1} parent=1 // pred_check_branch
      %52 = sbr.rel (0) target = $region21
    $region20: #{tpu_custom_call.1} parent=1 // pred_region
      %53 = dma.done [#allocation6], 256
    $region21: #{tpu_custom_call.1} parent=1 // pred_fallthru
      _
    // Predicated region
    $region22: #{tpu_custom_call.1} parent=1 // pred_check
      _
    $region23: #{tpu_custom_call.1} parent=1 // pred_check_branch
      %55 = sbr.rel (0) target = $region25
    $region24: #{tpu_custom_call.1} parent=1 // pred_region
      %56 = dma.done [#allocation6], 512
    $region25: #{tpu_custom_call.1} parent=1 // pred_fallthru
      _
    %v57 = vld [vmem:[#allocation2] sm:$0xf]
    %v58 = vld [vmem:[#allocation5] sm:$0xff]
    %v59 = vld [vmem:[#allocation5 + $0x8] sm:$0x3]
    %v60 = vld [vmem:[#allocation7] sm:$0xff]
    %v61 = vld [vmem:[#allocation7 + $0x8] sm:$0xff]
    %v62 = vld [vmem:[#allocation7 + $0x10] sm:$0x3]
    %v63 = vld [vmem:[#allocation7 + $0x18] sm:$0x3]
    %v64 = vmul.f32 %v57, %v57
    %vm65 = vcmask 257024
    %v66 = vsel %vm65, %v64, 0.0
    %67 = vadd.xlane.f32.xlu0 %v66
    %v68 = vpop.xlane.xlu0 %67
    %v69 = vmax.f32 %v68, 1e-24
    %v70 = vrsqrt.pop %v69
    %v71 = vmul.f32 %v57, %v70
    %vm72 = vcmask 261120
    %v74 = vsel %vm72, %v71, 0
    %v77 = vsel %vm72, %v58, 0
    %v80 = vsel %vm72, %v59, 0
    %82 = vmatprep.subr.mxu0 0.0
    %83 = vmatpush1.xpose.msra.mxu0 %v77
    %84 = vmatprep.subr.mxu0 0.0
    %85 = vmatpush1.xpose.msra.mxu0 %v80
    %86 = vmatprep.subr.mxu0 0.0
    %87 = vmatpush1.xpose.msra.mxu0 0.0
    %88 = vmatprep.subr.mxu0 0.0
    %89 = vmatpush1.xpose.msra.mxu0 0.0
    %90 = vmatprep.subr.mxu0 0.0
    %91 = vmatpush1.xpose.msra.mxu0 0.0
    %92 = vmatprep.subr.mxu0 0.0
    %93 = vmatpush1.xpose.msra.mxu0 0.0
    %94 = vmatprep.subr.mxu0 0.0
    %95 = vmatpush1.xpose.msra.mxu0 0.0
    %96 = vmatprep.subr.mxu0 0.0
    %97 = vmatpush1.xpose.msra.mxu0 0.0
    %98 = vmatprep.subr.mxu0 0.0
    %99 = vmatpush1.xpose.msra.mxu0 0.0
    %100 = vmatprep.subr.mxu0 0.0
    %101 = vmatpush1.xpose.msra.mxu0 0.0
    %102 = vmatprep.subr.mxu0 0.0
    %103 = vmatpush1.xpose.msra.mxu0 0.0
    %104 = vmatprep.subr.mxu0 0.0
    %105 = vmatpush1.xpose.msra.mxu0 0.0
    %106 = vmatprep.subr.mxu0 0.0
    %107 = vmatpush1.xpose.msra.mxu0 0.0
    %108 = vmatprep.subr.mxu0 0.0
    %109 = vmatpush1.xpose.msra.mxu0 0.0
    %110 = vmatprep.subr.mxu0 0.0
    %111 = vmatpush1.xpose.msra.mxu0 0.0
    %112 = vmatprep.subr.mxu0 0.0
    %113 = vmatpush1.xpose.msra.mxu0 0.0
    %114 = vmatprep.subr.mxu0 0.0
    %115 = vmatpush1.xpose.msra.mxu0 0.0
    %116 = vmatprep.subr.mxu0 0.0
    %117 = vmatpush1.xpose.msra.mxu0 0.0
    %118 = vmatprep.subr.mxu0 0.0
    %119 = vmatpush1.xpose.msra.mxu0 0.0
    %120 = vmatprep.subr.mxu0 0.0
    %121 = vmatpush1.xpose.msra.mxu0 0.0
    %122 = vmatprep.subr.mxu0 0.0
    %123 = vmatpush1.xpose.msra.mxu0 0.0
    %124 = vmatprep.subr.mxu0 0.0
    %125 = vmatpush1.xpose.msra.mxu0 0.0
    %126 = vmatprep.subr.mxu0 0.0
    %127 = vmatpush1.xpose.msra.mxu0 0.0
    %128 = vmatprep.subr.mxu0 0.0
    %129 = vmatpush1.xpose.msra.mxu0 0.0
    %130 = vmatprep.subr.mxu0 0.0
    %131 = vmatpush1.xpose.msra.mxu0 0.0
    %132 = vmatprep.subr.mxu0 0.0
    %133 = vmatpush1.xpose.msra.mxu0 0.0
    %134 = vmatprep.subr.mxu0 0.0
    %135 = vmatpush1.xpose.msra.mxu0 0.0
    %136 = vmatprep.subr.mxu0 0.0
    %137 = vmatpush1.xpose.msra.mxu0 0.0
    %138 = vmatprep.subr.mxu0 0.0
    %139 = vmatpush1.xpose.msra.mxu0 0.0
    %140 = vmatprep.subr.mxu0 0.0
    %141 = vmatpush1.xpose.msra.mxu0 0.0
    %142 = vmatprep.subr.mxu0 0.0
    %143 = vmatpush1.xpose.msra.mxu0 0.0
    %144 = vmatprep.subr.mxu0 0.0
    %145 = vmatpush1.xpose.msra.mxu0 0.0
    %146 = vmatprep.mubr.f32.mxu0 0.0
    %147 = vmatmul.mubr.f32.gmra.mrb[0].mxu0 %v74
    %v148 = vpop.f32.mrb[0].mxu0
    %v149 = vadd.f32 0.0, %v148
    %v150 = vpop.f32.mrb[0].mxu0
    %151 = vdwg.mxu0
    %v152 = vlaneseq
    %v153 = vand.u32 %v152, 127
    %vm154 = vcmask 76800
    %v155 = vsel %vm154, %v149, -inf
    %156 = vmax.xlane.f32.xlu0 %v155
    %v157 = vpop.xlane.xlu0 %156
    %vm158 = vcmp.eq.f32.partialorder %v149, %v157
    %v159 = vsel %vm158, %v153, 10
    %v160 = vsel %vm154, %v159, 2147483647
    %v161 = vand.u32 %v160, 65535
    %v162 = vshra.s32 %v160, 16
    %v163 = vcvt.s32.f32 %v161
    %v164 = vcvt.s32.f32 %v162
    %165 = vmin.xlane.f32.xlu0 %v164
    %v166 = vpop.xlane.xlu0 %165
    %vm167 = vcmp.eq.f32.partialorder %v164, %v166
    %v168 = vsel %vm167, %v163, inf
    %169 = vmin.xlane.f32.xlu0 %v168
    %v170 = vpop.xlane.xlu0 %169
    %v171 = vcvt.f32.s32 %v170
    %v172 = vcvt.f32.s32 %v166
    %v173 = vshll.u32 %v172, 16
    %v174 = vadd.s32 %v173, %v171
    %vm175 = vcmp.eq.s32.totalorder %v153, 0
    %v176 = vsel %vm175, %v174, 0
    %vm177 = vcmp.eq.s32.totalorder %v153, %v174
    %v178 = vsel %vm177, 1, 0
    %v179 = vcvt.s32.f32 %v178
    %v180 = vsel %vm154, %v179, 0.0
    %v181 = vrot.slane %v180, 4
    %v182 = vadd.f32 %v180, %v181
    %v183 = vrot.slane %v182, 2
    %v184 = vadd.f32 %v182, %v183
    %v185 = vrot.slane %v184, 1
    %v186 = vadd.f32 %v184, %v185
    %v187 = vadd.f32 %v186, 0.0
    %v188 = vsel %vm177, -inf, %v149
    %v189 = vsel %vm154, %v188, -inf
    %190 = vmax.xlane.f32.xlu0 %v189
    %v191 = vpop.xlane.xlu0 %190
    %vm192 = vcmp.eq.f32.partialorder %v188, %v191
    %v193 = vsel %vm192, %v153, 10
    %v194 = vsel %vm154, %v193, 2147483647
    %v195 = vand.u32 %v194, 65535
    %v196 = vshra.s32 %v194, 16
    %v197 = vcvt.s32.f32 %v195
    %v198 = vcvt.s32.f32 %v196
    %199 = vmin.xlane.f32.xlu0 %v198
    %v200 = vpop.xlane.xlu0 %199
    %vm201 = vcmp.eq.f32.partialorder %v198, %v200
    %v202 = vsel %vm201, %v197, inf
    %203 = vmin.xlane.f32.xlu0 %v202
    %v204 = vpop.xlane.xlu0 %203
    %v205 = vcvt.f32.s32 %v204
    %v206 = vcvt.f32.s32 %v200
    %v207 = vshll.u32 %v206, 16
    %v208 = vadd.s32 %v207, %v205
    %vm209 = vcmp.eq.s32.totalorder %v153, 1
    %v210 = vsel %vm209, %v208, %v176
    %vm211 = vcmp.eq.s32.totalorder %v153, %v208
    %v212 = vsel %vm211, 1, 0
    %v213 = vcvt.s32.f32 %v212
    %v214 = vsel %vm154, %v213, 0.0
    %v215 = vrot.slane %v214, 4
    %v216 = vadd.f32 %v214, %v215
    %v217 = vrot.slane %v216, 2
    %v218 = vadd.f32 %v216, %v217
    %v219 = vrot.slane %v218, 1
    %v220 = vadd.f32 %v218, %v219
    %v221 = vadd.f32 %v187, %v220
    %v222 = vsel %vm211, -inf, %v188
    %v223 = vsel %vm154, %v222, -inf
    %224 = vmax.xlane.f32.xlu0 %v223
    %v225 = vpop.xlane.xlu0 %224
    %vm226 = vcmp.eq.f32.partialorder %v222, %v225
    %v227 = vsel %vm226, %v153, 10
    %v228 = vsel %vm154, %v227, 2147483647
    %v229 = vand.u32 %v228, 65535
    %v230 = vshra.s32 %v228, 16
    %v231 = vcvt.s32.f32 %v229
    %v232 = vcvt.s32.f32 %v230
    %233 = vmin.xlane.f32.xlu0 %v232
    %v234 = vpop.xlane.xlu0 %233
    %vm235 = vcmp.eq.f32.partialorder %v232, %v234
    %v236 = vsel %vm235, %v231, inf
    %237 = vmin.xlane.f32.xlu0 %v236
    %v238 = vpop.xlane.xlu0 %237
    %v239 = vcvt.f32.s32 %v238
    %v240 = vcvt.f32.s32 %v234
    %v241 = vshll.u32 %v240, 16
    %v242 = vadd.s32 %v241, %v239
    %vm243 = vcmp.eq.s32.totalorder %v153, 2
    %v244 = vsel %vm243, %v242, %v210
    %vm245 = vcmp.eq.s32.totalorder %v153, %v242
    %v246 = vsel %vm245, 1, 0
    %v247 = vcvt.s32.f32 %v246
    %v248 = vsel %vm154, %v247, 0.0
    %v249 = vrot.slane %v248, 4
    %v250 = vadd.f32 %v248, %v249
    %v251 = vrot.slane %v250, 2
    %v252 = vadd.f32 %v250, %v251
    %v253 = vrot.slane %v252, 1
    %v254 = vadd.f32 %v252, %v253
    %v255 = vadd.f32 %v221, %v254
    %v256 = vsel %vm245, -inf, %v222
    %v257 = vsel %vm154, %v256, -inf
    %258 = vmax.xlane.f32.xlu0 %v257
    %v259 = vpop.xlane.xlu0 %258
    %vm260 = vcmp.eq.f32.partialorder %v256, %v259
    %v261 = vsel %vm260, %v153, 10
    %v262 = vsel %vm154, %v261, 2147483647
    %v263 = vand.u32 %v262, 65535
    %v264 = vshra.s32 %v262, 16
    %v265 = vcvt.s32.f32 %v263
    %v266 = vcvt.s32.f32 %v264
    %267 = vmin.xlane.f32.xlu0 %v266
    %v268 = vpop.xlane.xlu0 %267
    %vm269 = vcmp.eq.f32.partialorder %v266, %v268
    %v270 = vsel %vm269, %v265, inf
    %271 = vmin.xlane.f32.xlu0 %v270
    %v272 = vpop.xlane.xlu0 %271
    %v273 = vcvt.f32.s32 %v272
    %v274 = vcvt.f32.s32 %v268
    %v275 = vshll.u32 %v274, 16
    %v276 = vadd.s32 %v275, %v273
    %vm277 = vcmp.eq.s32.totalorder %v153, 3
    %v278 = vsel %vm277, %v276, %v244
    %vm279 = vcmp.eq.s32.totalorder %v153, %v276
    %v280 = vsel %vm279, 1, 0
    %v281 = vcvt.s32.f32 %v280
    %v282 = vsel %vm154, %v281, 0.0
    %v283 = vrot.slane %v282, 4
    %v284 = vadd.f32 %v282, %v283
    %v285 = vrot.slane %v284, 2
    %v286 = vadd.f32 %v284, %v285
    %v287 = vrot.slane %v286, 1
    %v288 = vadd.f32 %v286, %v287
    %v289 = vadd.f32 %v255, %v288
    %v290 = vsel %vm279, -inf, %v256
    %v291 = vsel %vm154, %v290, -inf
    %292 = vmax.xlane.f32.xlu0 %v291
    %v293 = vpop.xlane.xlu0 %292
    %vm294 = vcmp.eq.f32.partialorder %v290, %v293
    %v295 = vsel %vm294, %v153, 10
    %v296 = vsel %vm154, %v295, 2147483647
    %v297 = vand.u32 %v296, 65535
    %v298 = vshra.s32 %v296, 16
    %v299 = vcvt.s32.f32 %v297
    %v300 = vcvt.s32.f32 %v298
    %301 = vmin.xlane.f32.xlu0 %v300
    %v302 = vpop.xlane.xlu0 %301
    %vm303 = vcmp.eq.f32.partialorder %v300, %v302
    %v304 = vsel %vm303, %v299, inf
    %305 = vmin.xlane.f32.xlu0 %v304
    %v306 = vpop.xlane.xlu0 %305
    %v307 = vcvt.f32.s32 %v306
    %v308 = vcvt.f32.s32 %v302
    %v309 = vshll.u32 %v308, 16
    %v310 = vadd.s32 %v309, %v307
    %vm311 = vcmp.eq.s32.totalorder %v153, 4
    %v312 = vsel %vm311, %v310, %v278
    %vm313 = vcmp.eq.s32.totalorder %v153, %v310
    %v314 = vsel %vm313, 1, 0
    %v315 = vcvt.s32.f32 %v314
    %v316 = vsel %vm154, %v315, 0.0
    %v317 = vrot.slane %v316, 4
    %v318 = vadd.f32 %v316, %v317
    %v319 = vrot.slane %v318, 2
    %v320 = vadd.f32 %v318, %v319
    %v321 = vrot.slane %v320, 1
    %v322 = vadd.f32 %v320, %v321
    %v323 = vadd.f32 %v289, %v322
    %vm324 = vcmp.gt.f32.partialorder %v323, 0.0
    %v325 = vsel %vm324, 1, 0
    %v326 = vcvt.s32.f32 %v325
    %vm327 = vcmask 80896
    %v328 = vsel %vm327, %v326, 0.0
    %329 = vadd.xlane.f32.xlu0 %v328
    %v330 = vpop.xlane.xlu0 %329
    %vm331 = vcmp.lt.f32.partialorder %v330, 10.0
    %v332 = vsel %vm327, %v323, -inf
    %333 = vmax.xlane.f32.xlu0 %v332
    %v334 = vpop.xlane.xlu0 %333
    %vm335 = vcmp.eq.f32.partialorder %v323, %v334
    %v336 = vsel %vm335, %v153, 10
    %v337 = vsel %vm327, %v336, 2147483647
    %v338 = vand.u32 %v337, 65535
    %v339 = vshra.s32 %v337, 16
    %v340 = vcvt.s32.f32 %v338
    %v341 = vcvt.s32.f32 %v339
    %342 = vmin.xlane.f32.xlu0 %v341
    %v343 = vpop.xlane.xlu0 %342
    %vm344 = vcmp.eq.f32.partialorder %v341, %v343
    %v345 = vsel %vm344, %v340, inf
    %346 = vmin.xlane.f32.xlu0 %v345
    %v347 = vpop.xlane.xlu0 %346
    %v348 = vcvt.f32.s32 %v347
    %v349 = vcvt.f32.s32 %v343
    %v350 = vshll.u32 %v349, 16
    %v351 = vadd.s32 %v350, %v348
    %v352 = vsel %vm175, %v351, 0
    %vm353 = vcmp.eq.s32.totalorder %v153, %v351
    %v354 = vsel %vm353, -inf, %v323
    %v355 = vsel %vm327, %v354, -inf
    %356 = vmax.xlane.f32.xlu0 %v355
    %v357 = vpop.xlane.xlu0 %356
    %vm358 = vcmp.eq.f32.partialorder %v354, %v357
    %v359 = vsel %vm358, %v153, 10
    %v360 = vsel %vm327, %v359, 2147483647
    %v361 = vand.u32 %v360, 65535
    %v362 = vshra.s32 %v360, 16
    %v363 = vcvt.s32.f32 %v361
    %v364 = vcvt.s32.f32 %v362
    %365 = vmin.xlane.f32.xlu0 %v364
    %v366 = vpop.xlane.xlu0 %365
    %vm367 = vcmp.eq.f32.partialorder %v364, %v366
    %v368 = vsel %vm367, %v363, inf
    %369 = vmin.xlane.f32.xlu0 %v368
    %v370 = vpop.xlane.xlu0 %369
    %v371 = vcvt.f32.s32 %v370
    %v372 = vcvt.f32.s32 %v366
    %v373 = vshll.u32 %v372, 16
    %v374 = vadd.s32 %v373, %v371
    %v375 = vsel %vm209, %v374, %v352
    %vm376 = vcmp.eq.s32.totalorder %v153, %v374
    %v377 = vsel %vm376, -inf, %v354
    %v378 = vsel %vm327, %v377, -inf
    %379 = vmax.xlane.f32.xlu0 %v378
    %v380 = vpop.xlane.xlu0 %379
    %vm381 = vcmp.eq.f32.partialorder %v377, %v380
    %v382 = vsel %vm381, %v153, 10
    %v383 = vsel %vm327, %v382, 2147483647
    %v384 = vand.u32 %v383, 65535
    %v385 = vshra.s32 %v383, 16
    %v386 = vcvt.s32.f32 %v384
    %v387 = vcvt.s32.f32 %v385
    %388 = vmin.xlane.f32.xlu0 %v387
    %v389 = vpop.xlane.xlu0 %388
    %vm390 = vcmp.eq.f32.partialorder %v387, %v389
    %v391 = vsel %vm390, %v386, inf
    %392 = vmin.xlane.f32.xlu0 %v391
    %v393 = vpop.xlane.xlu0 %392
    %v394 = vcvt.f32.s32 %v393
    %v395 = vcvt.f32.s32 %v389
    %v396 = vshll.u32 %v395, 16
    %v397 = vadd.s32 %v396, %v394
    %v398 = vsel %vm243, %v397, %v375
    %vm399 = vcmp.eq.s32.totalorder %v153, %v397
    %v400 = vsel %vm399, -inf, %v377
    %v401 = vsel %vm327, %v400, -inf
    %402 = vmax.xlane.f32.xlu0 %v401
    %v403 = vpop.xlane.xlu0 %402
    %vm404 = vcmp.eq.f32.partialorder %v400, %v403
    %v405 = vsel %vm404, %v153, 10
    %v406 = vsel %vm327, %v405, 2147483647
    %v407 = vand.u32 %v406, 65535
    %v408 = vshra.s32 %v406, 16
    %v409 = vcvt.s32.f32 %v407
    %v410 = vcvt.s32.f32 %v408
    %411 = vmin.xlane.f32.xlu0 %v410
    %v412 = vpop.xlane.xlu0 %411
    %vm413 = vcmp.eq.f32.partialorder %v410, %v412
    %v414 = vsel %vm413, %v409, inf
    %415 = vmin.xlane.f32.xlu0 %v414
    %v416 = vpop.xlane.xlu0 %415
    %v417 = vcvt.f32.s32 %v416
    %v418 = vcvt.f32.s32 %v412
    %v419 = vshll.u32 %v418, 16
    %v420 = vadd.s32 %v419, %v417
    %v421 = vsel %vm277, %v420, %v398
    %vm422 = vcmp.eq.s32.totalorder %v153, %v420
    %v423 = vsel %vm422, -inf, %v400
    %v424 = vsel %vm327, %v423, -inf
    %425 = vmax.xlane.f32.xlu0 %v424
    %v426 = vpop.xlane.xlu0 %425
    %vm427 = vcmp.eq.f32.partialorder %v423, %v426
    %v428 = vsel %vm427, %v153, 10
    %v429 = vsel %vm327, %v428, 2147483647
    %v430 = vand.u32 %v429, 65535
    %v431 = vshra.s32 %v429, 16
    %v432 = vcvt.s32.f32 %v430
    %v433 = vcvt.s32.f32 %v431
    %434 = vmin.xlane.f32.xlu0 %v433
    %v435 = vpop.xlane.xlu0 %434
    %vm436 = vcmp.eq.f32.partialorder %v433, %v435
    %v437 = vsel %vm436, %v432, inf
    %438 = vmin.xlane.f32.xlu0 %v437
    %v439 = vpop.xlane.xlu0 %438
    %v440 = vcvt.f32.s32 %v439
    %v441 = vcvt.f32.s32 %v435
    %v442 = vshll.u32 %v441, 16
    %v443 = vadd.s32 %v442, %v440
    %v444 = vsel %vm311, %v443, %v421
    %v445 = vsel %vm331, 1, 0
    %vm446 = vcmp.eq.s32.totalorder %v445, 1
    %v447 = vsel %vm446, %v444, %v312
    %v448 = vlaneseq
    %v449 = vshrl.u32 %v448, 7
    %v450 = vadd.s32 %v449, 8
    %v451 = vadd.s32 %v449, 16
    %v452 = vmul.u32 %v153, 5
    %vm453 = vcmp.ge.s32.totalorder %v449, %v452
    %vm454 = vcmp.ge.s32.totalorder %v450, %v452
    %vm455 = vcmp.ge.s32.totalorder %v451, %v452
    %v456 = vadd.s32 %v153, 1
    %v457 = vmul.u32 %v456, 5
    %vm458 = vcmp.lt.s32.totalorder %v449, %v457
    %vm459 = vcmp.lt.s32.totalorder %v450, %v457
    %vm460 = vcmp.lt.s32.totalorder %v451, %v457
    %vm461 = vmand %vm453, %vm458
    %vm462 = vmand %vm454, %vm459
    %vm463 = vmand %vm455, %vm460
    %v464 = vsel %vm461, 1, 0
    %v465 = vsel %vm462, 1, 0
    %v466 = vsel %vm463, 1, 0
    %v467 = vcvt.s32.f32 %v464
    %v468 = vcvt.s32.f32 %v465
    %v469 = vcvt.s32.f32 %v466
    %v470 = vcvt.s32.f32 %v153
    %v471 = vmul.f32 %v467, %v470
    %v472 = vmul.f32 %v468, %v470
    %v473 = vmul.f32 %v469, %v470
    %vm474 = vcmask 31744
    %v475 = vsel %vm474, %v471, 0.0
    %476 = vadd.xlane.f32.xlu0 %v475
    %v477 = vpop.xlane.xlu0 %476
    %v478 = vsel %vm474, %v472, 0.0
    %479 = vadd.xlane.f32.xlu0 %v478
    %v480 = vpop.xlane.xlu0 %479
    %vm481 = vcmask 27648
    %v482 = vsel %vm481, %v473, 0.0
    %483 = vadd.xlane.f32.xlu0 %v482
    %v484 = vpop.xlane.xlu0 %483
    %v485 = vcvt.s32.f32 %v447
    %v487 = vsel %vm474, %v467, 0
    %v490 = vsel %vm474, %v468, 0
    %v493 = vsel %vm474, %v469, 0
    %vm495 = vcmask 1043456
    %v497 = vsel %vm495, %v485, 0
    %499 = vmatprep.subr.mxu0 0.0
    %500 = vmatpush1.msra.mxu0 %v497
    %501 = vmatprep.subr.mxu0 0.0
    %502 = vmatpush1.msra.mxu0 0.0
    %503 = vmatprep.subr.mxu0 0.0
    %504 = vmatpush1.msra.mxu0 0.0
    %505 = vmatprep.subr.mxu0 0.0
    %506 = vmatpush1.msra.mxu0 0.0
    %507 = vmatprep.subr.mxu0 0.0
    %508 = vmatpush1.msra.mxu0 0.0
    %509 = vmatprep.subr.mxu0 0.0
    %510 = vmatpush1.msra.mxu0 0.0
    %511 = vmatprep.subr.mxu0 0.0
    %512 = vmatpush1.msra.mxu0 0.0
    %513 = vmatprep.subr.mxu0 0.0
    %514 = vmatpush1.msra.mxu0 0.0
    %515 = vmatprep.subr.mxu0 0.0
    %516 = vmatpush1.msra.mxu0 0.0
    %517 = vmatprep.subr.mxu0 0.0
    %518 = vmatpush1.msra.mxu0 0.0
    %519 = vmatprep.subr.mxu0 0.0
    %520 = vmatpush1.msra.mxu0 0.0
    %521 = vmatprep.subr.mxu0 0.0
    %522 = vmatpush1.msra.mxu0 0.0
    %523 = vmatprep.subr.mxu0 0.0
    %524 = vmatpush1.msra.mxu0 0.0
    %525 = vmatprep.subr.mxu0 0.0
    %526 = vmatpush1.msra.mxu0 0.0
    %527 = vmatprep.subr.mxu0 0.0
    %528 = vmatpush1.msra.mxu0 0.0
    %529 = vmatprep.subr.mxu0 0.0
    %530 = vmatpush1.msra.mxu0 0.0
    %531 = vmatprep.subr.mxu0 0.0
    %532 = vmatpush1.msra.mxu0 0.0
    %533 = vmatprep.subr.mxu0 0.0
    %534 = vmatpush1.msra.mxu0 0.0
    %535 = vmatprep.subr.mxu0 0.0
    %536 = vmatpush1.msra.mxu0 0.0
    %537 = vmatprep.subr.mxu0 0.0
    %538 = vmatpush1.msra.mxu0 0.0
    %539 = vmatprep.subr.mxu0 0.0
    %540 = vmatpush1.msra.mxu0 0.0
    %541 = vmatprep.subr.mxu0 0.0
    %542 = vmatpush1.msra.mxu0 0.0
    %543 = vmatprep.subr.mxu0 0.0
    %544 = vmatpush1.msra.mxu0 0.0
    %545 = vmatprep.subr.mxu0 0.0
    %546 = vmatpush1.msra.mxu0 0.0
    %547 = vmatprep.subr.mxu0 0.0
    %548 = vmatpush1.msra.mxu0 0.0
    %549 = vmatprep.subr.mxu0 0.0
    %550 = vmatpush1.msra.mxu0 0.0
    %551 = vmatprep.subr.mxu0 0.0
    %552 = vmatpush1.msra.mxu0 0.0
    %553 = vmatprep.subr.mxu0 0.0
    %554 = vmatpush1.msra.mxu0 0.0
    %555 = vmatprep.subr.mxu0 0.0
    %556 = vmatpush1.msra.mxu0 0.0
    %557 = vmatprep.subr.mxu0 0.0
    %558 = vmatpush1.msra.mxu0 0.0
    %559 = vmatprep.subr.mxu0 0.0
    %560 = vmatpush1.msra.mxu0 0.0
    %561 = vmatprep.subr.mxu0 0.0
    %562 = vmatpush1.msra.mxu0 0.0
    %563 = vmatprep.mubr.f32.mxu0 0.0
    %564 = vmatmul.mubr.f32.gmra.mrb[0].mxu0 %v487
    %v565 = vpop.f32.mrb[0].mxu0
    %v566 = vadd.f32 0.0, %v565
    %v567 = vpop.f32.mrb[0].mxu0
    %568 = vmatprep.mubr.f32.mxu0 0.0
    %569 = vmatmul.mubr.f32.gmra.mrb[0].mxu0 %v490
    %v570 = vpop.f32.mrb[0].mxu0
    %v571 = vadd.f32 0.0, %v570
    %v572 = vpop.f32.mrb[0].mxu0
    %573 = vmatprep.mubr.f32.mxu0 0.0
    %574 = vmatmul.mubr.f32.gmra.mrb[0].mxu0 %v493
    %v575 = vpop.f32.mrb[0].mxu0
    %v576 = vadd.f32 0.0, %v575
    %v577 = vpop.f32.mrb[0].mxu0
    %578 = vdwg.mxu0
    %v579 = vcvt.s32.f32 %v449
    %v580 = vcvt.s32.f32 %v450
    %v581 = vcvt.s32.f32 %v451
    %v582 = vmul.f32 %v477, 5.0
    %v583 = vmul.f32 %v480, 5.0
    %v584 = vmul.f32 %v484, 5.0
    %v585 = vsub.f32 %v579, %v582
    %v586 = vsub.f32 %v580, %v583
    %v587 = vsub.f32 %v581, %v584
    %vm588 = vcmp.eq.f32.partialorder %v470, %v585
    %vm589 = vcmp.eq.f32.partialorder %v470, %v586
    %vm590 = vcmp.eq.f32.partialorder %v470, %v587
    %v591 = vsel %vm588, %v566, 0.0
    %v592 = vsel %vm589, %v571, 0.0
    %v593 = vsel %vm590, %v576, 0.0
    %vm594 = vcmask 39936
    %v595 = vsel %vm594, %v591, 0.0
    %596 = vadd.xlane.f32.xlu0 %v595
    %v597 = vpop.xlane.xlu0 %596
    %v598 = vsel %vm594, %v592, 0.0
    %599 = vadd.xlane.f32.xlu0 %v598
    %v600 = vpop.xlane.xlu0 %599
    %vm601 = vcmask 35840
    %v602 = vsel %vm601, %v593, 0.0
    %603 = vadd.xlane.f32.xlu0 %v602
    %v604 = vpop.xlane.xlu0 %603
    %v605 = vadd.f32 %v597, 0.5
    %v606 = vadd.f32 %v600, 0.5
    %v607 = vadd.f32 %v604, 0.5
    %v608 = vcvt.f32.s32.to.zero.pseudo %v605
    %v609 = vcvt.f32.s32.to.zero.pseudo %v606
    %v610 = vcvt.f32.s32.to.zero.pseudo %v607
    %vm611 = vcmp.eq.s32.totalorder %v153, %v608
    %vm612 = vcmp.eq.s32.totalorder %v153, %v609
    %vm613 = vcmp.eq.s32.totalorder %v153, %v610
    %v614 = vsel %vm611, 1, 0
    %v615 = vsel %vm612, 1, 0
    %v616 = vsel %vm613, 1, 0
    %v617 = vcvt.s32.f32 %v614
    %v618 = vcvt.s32.f32 %v615
    %v619 = vcvt.s32.f32 %v616
    %v621 = vsel %vm327, %v617, 0
    %v624 = vsel %vm327, %v618, 0
    %v627 = vsel %vm327, %v619, 0
    %vm629 = vcmask 1041408
    %v631 = vsel %vm629, %v62, 0
    %v634 = vsel %vm629, %v63, 0
    %636 = vmatprep.subr.mxu0 %v61
    %637 = vmatpush1.msra.mxu0 %v60
    %638 = vmatprep.subr.mxu0 %v634
    %639 = vmatpush1.msra.mxu0 %v631
    %640 = vmatprep.subr.mxu0 0.0
    %641 = vmatpush1.msra.mxu0 0.0
    %642 = vmatprep.subr.mxu0 0.0
    %643 = vmatpush1.msra.mxu0 0.0
    %644 = vmatprep.subr.mxu0 0.0
    %645 = vmatpush1.msra.mxu0 0.0
    %646 = vmatprep.subr.mxu0 0.0
    %647 = vmatpush1.msra.mxu0 0.0
    %648 = vmatprep.subr.mxu0 0.0
    %649 = vmatpush1.msra.mxu0 0.0
    %650 = vmatprep.subr.mxu0 0.0
    %651 = vmatpush1.msra.mxu0 0.0
    %652 = vmatprep.subr.mxu0 0.0
    %653 = vmatpush1.msra.mxu0 0.0
    %654 = vmatprep.subr.mxu0 0.0
    %655 = vmatpush1.msra.mxu0 0.0
    %656 = vmatprep.subr.mxu0 0.0
    %657 = vmatpush1.msra.mxu0 0.0
    %658 = vmatprep.subr.mxu0 0.0
    %659 = vmatpush1.msra.mxu0 0.0
    %660 = vmatprep.subr.mxu0 0.0
    %661 = vmatpush1.msra.mxu0 0.0
    %662 = vmatprep.subr.mxu0 0.0
    %663 = vmatpush1.msra.mxu0 0.0
    %664 = vmatprep.subr.mxu0 0.0
    %665 = vmatpush1.msra.mxu0 0.0
    %666 = vmatprep.subr.mxu0 0.0
    %667 = vmatpush1.msra.mxu0 0.0
    %668 = vmatprep.subr.mxu0 0.0
    %669 = vmatpush1.msra.mxu0 0.0
    %670 = vmatprep.subr.mxu0 0.0
    %671 = vmatpush1.msra.mxu0 0.0
    %672 = vmatprep.subr.mxu0 0.0
    %673 = vmatpush1.msra.mxu0 0.0
    %674 = vmatprep.subr.mxu0 0.0
    %675 = vmatpush1.msra.mxu0 0.0
    %676 = vmatprep.subr.mxu0 0.0
    %677 = vmatpush1.msra.mxu0 0.0
    %678 = vmatprep.subr.mxu0 0.0
    %679 = vmatpush1.msra.mxu0 0.0
    %680 = vmatprep.subr.mxu0 0.0
    %681 = vmatpush1.msra.mxu0 0.0
    %682 = vmatprep.subr.mxu0 0.0
    %683 = vmatpush1.msra.mxu0 0.0
    %684 = vmatprep.subr.mxu0 0.0
    %685 = vmatpush1.msra.mxu0 0.0
    %686 = vmatprep.subr.mxu0 0.0
    %687 = vmatpush1.msra.mxu0 0.0
    %688 = vmatprep.subr.mxu0 0.0
    %689 = vmatpush1.msra.mxu0 0.0
    %690 = vmatprep.subr.mxu0 0.0
    %691 = vmatpush1.msra.mxu0 0.0
    %692 = vmatprep.subr.mxu0 0.0
    %693 = vmatpush1.msra.mxu0 0.0
    %694 = vmatprep.subr.mxu0 0.0
    %695 = vmatpush1.msra.mxu0 0.0
    %696 = vmatprep.subr.mxu0 0.0
    %697 = vmatpush1.msra.mxu0 0.0
    %698 = vmatprep.subr.mxu0 0.0
    %699 = vmatpush1.msra.mxu0 0.0
    %700 = vmatprep.mubr.f32.mxu0 0.0
    %701 = vmatmul.mubr.f32.gmra.mrb[0].mxu0 %v621
    %v702 = vpop.f32.mrb[0].mxu0
    %v703 = vadd.f32 0.0, %v702
    %v704 = vpop.f32.mrb[0].mxu0
    %v705 = vadd.f32 0.0, %v704
    %706 = vmatprep.mubr.f32.mxu0 0.0
    %707 = vmatmul.mubr.f32.gmra.mrb[0].mxu0 %v624
    %v708 = vpop.f32.mrb[0].mxu0
    %v709 = vadd.f32 0.0, %v708
    %v710 = vpop.f32.mrb[0].mxu0
    %v711 = vadd.f32 0.0, %v710
    %712 = vmatprep.mubr.f32.mxu0 0.0
    %713 = vmatmul.mubr.f32.gmra.mrb[0].mxu0 %v627
    %v714 = vpop.f32.mrb[0].mxu0
    %v715 = vadd.f32 0.0, %v714
    %v716 = vpop.f32.mrb[0].mxu0
    %v717 = vadd.f32 0.0, %v716
    %718 = vdwg.mxu0
    %719 = vst [vmem:[#allocation8] sm:$0xff] %v703
    %720 = vst.msk [vmem:[#allocation8 + $0x8] sm:$0xff] %vm72, %v705
    %721 = vst [vmem:[#allocation8 + $0x10] sm:$0xff] %v709
    %722 = vst.msk [vmem:[#allocation8 + $0x18] sm:$0xff] %vm72, %v711
    %723 = vst [vmem:[#allocation8 + $0x20] sm:$0xf] %v715
    %724 = vst.msk [vmem:[#allocation8 + $0x28] sm:$0xf] %vm65, %v717
    %v725 = vsel %vm154, %v149, 0.0
    %v726 = vrot.slane %v725, 4
    %v727 = vadd.f32 %v725, %v726
    %v728 = vrot.slane %v727, 2
    %v729 = vadd.f32 %v727, %v728
    %v730 = vrot.slane %v729, 1
    %v731 = vadd.f32 %v729, %v730
    %v732 = vsel %vm327, %v617, 0.0
    %v733 = vsel %vm327, %v618, 0.0
    %v734 = vadd.f32 %v732, %v733
    %v735 = vsel %vm154, %v619, 0.0
    %v736 = vadd.f32 %v734, %v735
    %v737 = vrot.slane %v736, 4
    %v738 = vadd.f32 %v736, %v737
    %v739 = vrot.slane %v738, 2
    %v740 = vadd.f32 %v738, %v739
    %v741 = vrot.slane %v740, 1
    %v742 = vadd.f32 %v740, %v741
    %v743 = vmul.f32 %v731, %v742
    %v744 = vsel %vm327, %v743, 0.0
    %745 = vadd.xlane.f32.xlu0 %v744
    %v746 = vpop.xlane.xlu0 %745
    %v747 = vrcp.pop 16.0
    %v748 = vmul.f32 %v746, %v747
    %vm749 = vcmask 0
    %750 = vst.msk [vmem:[#allocation9] sm:$0x1] %vm749, %v748
    // Predicated region
    $region26: #{tpu_custom_call.1} parent=1 // pred_check
      _
    $region27: #{tpu_custom_call.1} parent=1 // pred_check_branch
      %752 = sbr.rel (0) target = $region29
    $region28: #{tpu_custom_call.1} parent=1 // pred_region
      %s754 = ssub.s32 768, 768
      %755 = vsyncadd [#allocation4], %s754
      %s756 = sshll.u32 [#allocation8], 4
      %s757 = int_to_ptr.vmem [resolvable:$true] %s756
      %762 = dma.vmem_to_hbm [thread:$0]  %s757, 768, %s3, [#allocation4], 256, 256, 16
    $region29: #{tpu_custom_call.1} parent=1 // pred_fallthru
      _
    // Predicated region
    $region30: #{tpu_custom_call.1} parent=1 // pred_check
      _
    $region31: #{tpu_custom_call.1} parent=1 // pred_check_branch
      %764 = sbr.rel (0) target = $region33
    $region32: #{tpu_custom_call.1} parent=1 // pred_region
      %s766 = ssub.s32 16, 16
      %767 = vsyncadd [#allocation10], %s766
      %s769 = sshll.u32 [#allocation9], 4
      %s770 = int_to_ptr.vmem [resolvable:$true] %s769
      %772 = dma.vmem_to_hbm [thread:$0]  %s770, 16, %s4, [#allocation10]
    $region33: #{tpu_custom_call.1} parent=1 // pred_fallthru
      _
    // Predicated region
    $region34: #{tpu_custom_call.1} parent=1 // pred_check
      _
    $region35: #{tpu_custom_call.1} parent=1 // pred_check_branch
      %774 = sbr.rel (0) target = $region37
    $region36: #{tpu_custom_call.1} parent=1 // pred_region
      %775 = dma.done [#allocation4], 768
    $region37: #{tpu_custom_call.1} parent=1 // pred_fallthru
      _
    // Predicated region
    $region38: #{tpu_custom_call.1} parent=1 // pred_check
      _
    $region39: #{tpu_custom_call.1} parent=1 // pred_check_branch
      %777 = sbr.rel (0) target = $region41
    $region40: #{tpu_custom_call.1} parent=1 // pred_region
      %778 = dma.done [#allocation10], 16
    $region41: #{tpu_custom_call.1} parent=1 // pred_fallthru
      _
    %779 = vsyncpa [#allocation3], 1
    %780 = vsyncpa [#allocation6], 1
    %781 = vsyncpa [#allocation4], 1
    %782 = vsyncpa [#allocation10], 1

</llo_original>
